<compile_context>
chip_gen: v7x
topology: tpu7x:2x2x1
jax: 0.10.0
libtpu: 0.0.40
codegen_flags: <defaults>
</compile_context>

<pallas_src>
import functools

import jax
import jax.numpy as jnp
from jax import lax
from jax.experimental import pallas as pl
from jax.experimental.pallas import tpu as pltpu

BN_EPS = 1e-5


# ----------------------------- parameter setup (glue) -----------------------------

def init_params(key, c_in, c_mid, c_out):
    """Deterministic raw parameters: conv weights + BN (gamma, beta, mean, var)."""
    def bn(k, c):
        k1, k2, k3, k4 = jax.random.split(k, 4)
        gamma = jax.random.uniform(k1, (c,), jnp.float32, 0.5, 1.5)
        beta = 0.1 * jax.random.normal(k2, (c,), jnp.float32)
        mean = 0.1 * jax.random.normal(k3, (c,), jnp.float32)
        var = jax.random.uniform(k4, (c,), jnp.float32, 0.5, 1.5)
        return (gamma, beta, mean, var)

    k = jax.random.split(key, 8)
    w1 = 0.2 * jax.random.normal(k[0], (c_in, c_mid), jnp.float32)         # conv1 1x1
    w2 = 0.2 * jax.random.normal(k[1], (3, 3, c_mid, c_mid), jnp.float32)  # conv2 3x3 (HWIO)
    w3 = 0.2 * jax.random.normal(k[2], (c_mid, c_out), jnp.float32)        # conv3 1x1
    wd = 0.2 * jax.random.normal(k[3], (c_in, c_out), jnp.float32)         # downsample 1x1
    return ((w1, bn(k[4], c_mid)), (w2, bn(k[5], c_mid)),
            (w3, bn(k[6], c_out)), (wd, bn(k[7], c_out)))


def _fold_bn(w, gamma, beta, mean, var):
    """Fold eval-mode BN into a bias-free conv: y = conv(x, w*s) + (beta - mean*s)."""
    s = gamma / jnp.sqrt(var + BN_EPS)
    return w * s, (beta - mean * s)[None, :]


def fold_params(raw):
    return tuple(_fold_bn(w, *bn) for (w, bn) in raw)


def _interp_rows(out_size, in_size, pad_before, total_out):
    """1-D bilinear (align_corners=True) interpolation matrix, embedded into
    (total_out, in_size) with zero rows where F.pad would insert zeros."""
    src = jnp.arange(out_size, dtype=jnp.float32) * (in_size - 1) / (out_size - 1)
    i0 = jnp.floor(src).astype(jnp.int32)
    i1 = jnp.clip(i0 + 1, 0, in_size - 1)
    f = src - i0.astype(jnp.float32)
    m = ((1.0 - f)[:, None] * jax.nn.one_hot(i0, in_size, dtype=jnp.float32)
         + f[:, None] * jax.nn.one_hot(i1, in_size, dtype=jnp.float32))
    full = jnp.zeros((total_out, in_size), jnp.float32)
    return full.at[pad_before:pad_before + out_size].set(m)


# ----------------------------- Pallas kernel -----------------------------

def _up_bottleneck_kernel(u_ref, mask_ref, x1_ref, x2_ref,
                          w1d_ref, w2m_ref, w3_ref, bias_ref,
                          out_ref, *, w_img, use_tpu_roll):
    """One grid step: B images (B=1 per-image grid, or B=N with batch on lanes).

    Layout: channels on sublanes, pixels (flattened, possibly batch-folded) on
    lanes, so every matmul RHS / output slab is lane-dense.
    """
    f32 = jnp.float32
    B = x1_ref.shape[0]                          # per-step batch
    c_mid = w2m_ref.shape[0]
    c_out = w3_ref.shape[0]
    x2 = x2_ref[0]                               # (C2, L)
    L = x2.shape[-1]                             # B * H2 * W2, pixels on lanes

    if use_tpu_roll:
        roll = lambda v, s: pltpu.roll(v, s, axis=1)     # XLU lane rotate (free-ish slot)
    else:
        # Plain-JAX fallback for the CPU / interpret path (no Mosaic primitives).
        roll = lambda v, s: jnp.roll(v, s, axis=1)

    # ---- bilinear x2 upsample (align_corners) + F.pad: one dense matmul per image ----
    u = u_ref[...]                                                     # (H1*W1, H2*W2) f32
    ups = [jnp.dot(x1_ref[n], u, preferred_element_type=f32) for n in range(B)]
    up = ups[0] if B == 1 else jnp.concatenate(ups, axis=1)            # (C1, L), lane-dense

    # ---- channel concat + fused conv1/downsample 1x1 (one matmul, K = C_in) ----
    cat = jnp.concatenate([x2, up], axis=0)                            # (C_in, L)
    bias = bias_ref[...]                                               # (2*c_mid+c_out, 1)
    n1 = c_mid + c_out
    z = jnp.dot(w1d_ref[...], cat, preferred_element_type=f32) + bias[:n1]   # (c_mid+c_out, L)
    y = jnp.maximum(z[:c_mid], 0.0)                                    # conv1 + bn1 + relu
    identity = z[c_mid:n1]                                             # downsample + bn (+ bn3 shift)

    # ---- 3x3 conv (pad=1) as ONE matmul over roll+mask shifted taps ----
    masks = mask_ref[...]                                              # (4, L) f32
    m_top, m_bot, m_left, m_right = masks[0:1], masks[1:2], masks[2:3], masks[3:4]
    top = roll(y, w_img) * m_top                                       # value from row h-1
    bot = roll(y, L - w_img) * m_bot                                   # value from row h+1
    yv = jnp.concatenate([top, y, bot], axis=0)                        # (3*c_mid, L)
    left = roll(yv, 1) * m_left                                        # value from col w-1
    right = roll(yv, L - 1) * m_right                                  # value from col w+1
    patches = jnp.concatenate([left, yv, right], axis=0)               # (9*c_mid, L)
    y = jnp.dot(w2m_ref[...], patches, preferred_element_type=f32) + bias[n1:n1 + c_mid]
    y = jnp.maximum(y, 0.0)                                            # conv2 + bn2 + relu

    # ---- conv3 (1x1) + residual + final ReLU (bn3 shift already in identity) ----
    y = jnp.dot(w3_ref[...], y, preferred_element_type=f32)            # (c_out, L)
    out_ref[0] = jnp.maximum(y + identity, 0.0).astype(out_ref.dtype)


# ----------------------------- wrapper -----------------------------

def up_forward(x1_nchw, x2_nchw, folded_params, *, fuse_batch=False, use_tpu_roll=None):
    """Forward of `Up` on NCHW inputs; returns NCHW output (float32).

    fuse_batch=False : grid=(N,), "parallel"  -> best on v7x (2 TensorCores).
    fuse_batch=True  : grid=(1,), batch folded onto the lane axis -> best on
                       single-TC v5e/v6e (no per-step pipeline overhead, wider lanes).
    """
    if use_tpu_roll is None:
        use_tpu_roll = (jax.default_backend() == "tpu")

    N, C1, H1, W1 = x1_nchw.shape
    N2, C2, H2, W2 = x2_nchw.shape
    assert N2 == N
    Ho, Wo = 2 * H1, 2 * W1
    dY, dX = H2 - Ho, W2 - Wo
    # NOTE: matches the module's intended usage (upsampled map no larger than x2).
    assert Ho >= 2 and Wo >= 2 and dY >= 0 and dX >= 0, "unsupported shapes"
    P = H1 * W1
    M = H2 * W2

    (w1, b1), (w2, b2), (w3, b3), (wd, bd) = folded_params
    c_in, c_mid = w1.shape
    c_out = w3.shape[1]
    assert c_in == C1 + C2

    # Dense upsample+pad matrix U (P, M): U = kron(Uh, Uw)^T, zero rows where
    # F.pad inserts zeros.  64 KiB f32 at these sizes; kept in f32 always.
    a_h = _interp_rows(Ho, H1, dY // 2, H2)                    # (H2, H1)
    a_w = _interp_rows(Wo, W1, dX // 2, W2)                    # (W2, W1)
    u = jnp.kron(a_h, a_w).T.astype(jnp.float32)               # (P, M)

    if fuse_batch:
        steps, B, L = 1, N, N * M
        # lanes ordered n*M + (h*W2 + w)
        x2f = jnp.transpose(x2_nchw, (1, 0, 2, 3)).reshape(1, C2, L).astype(jnp.float32)
    else:
        steps, B, L = N, 1, M
        x2f = x2_nchw.reshape(N, C2, M).astype(jnp.float32)
    x1f = x1_nchw.reshape(N, C1, P).astype(jnp.float32)

    # Boundary masks for the 3x3 taps, hoisted out of the kernel (grid-invariant).
    pix = jnp.arange(M, dtype=jnp.int32)
    row, col = pix // W2, pix % W2
    masks = jnp.stack([(row > 0), (row < H2 - 1),
                       (col > 0), (col < W2 - 1)]).astype(jnp.float32)   # (4, M)
    if fuse_batch:
        masks = jnp.tile(masks, (1, N))                                   # (4, L)

    # Packed parameters (fewer / fatter refs):
    #   w1d : conv1 and downsample 1x1 weights stacked to (c_mid+c_out, c_in)
    #   w2m : 3x3 weights flattened (co, dx, dy, ci) -> (c_mid, 9*c_mid)
    #   w3t : conv3 1x1 weights (c_out, c_mid)
    #   bias: [b1 ; bd + b3 (bn3 shift folded into the residual) ; b2] as a column
    w1d = jnp.concatenate([w1.T, wd.T], axis=0).astype(jnp.float32)        # (c_mid+c_out, c_in)
    w2m = jnp.transpose(w2, (3, 1, 0, 2)).reshape(c_mid, 9 * c_mid).astype(jnp.float32)
    w3t = w3.T.astype(jnp.float32)                                          # (c_out, c_mid)
    bias = jnp.concatenate([b1.reshape(-1), (bd + b3).reshape(-1), b2.reshape(-1)])
    bias = bias.reshape(2 * c_mid + c_out, 1).astype(jnp.float32)

    kernel = functools.partial(_up_bottleneck_kernel, w_img=W2,
                               use_tpu_roll=use_tpu_roll)

    def inv(*shape):          # grid-invariant input (DMA'd once)
        z = (0,) * len(shape)
        return pl.BlockSpec(shape, lambda b, z=z: z)

    def per_step(*shape):     # leading axis indexed by the grid step
        r = (0,) * (len(shape) - 1)
        return pl.BlockSpec(shape, lambda b, r=r: (b,) + r)

    out = pl.pallas_call(
        kernel,
        out_shape=jax.ShapeDtypeStruct((steps, c_out, L), jnp.float32),
        grid_spec=pltpu.PrefetchScalarGridSpec(
            num_scalar_prefetch=0,
            grid=(steps,),
            in_specs=[
                inv(P, M),                        # dense upsample matrix
                inv(4, L),                        # boundary masks
                per_step(B, C1, P),               # x1 (flattened low-res map)
                per_step(1, C2, L),               # x2 (lane-dense)
                inv(c_mid + c_out, c_in),         # fused conv1 + downsample weights
                inv(c_mid, 9 * c_mid),            # fused 3x3 weights
                inv(c_out, c_mid),                # conv3 weights
                inv(2 * c_mid + c_out, 1),        # packed folded-BN biases
            ],
            out_specs=per_step(1, c_out, L),
        ),
        compiler_params=pltpu.CompilerParams(
            dimension_semantics=("arbitrary",) if fuse_batch else ("parallel",)),
    )(u, masks, x1f, x2f, w1d, w2m, w3t, bias)

    if fuse_batch:
        # (1, c_out, N*M) -> (N, c_out, H2, W2)
        return jnp.transpose(out.reshape(c_out, N, H2, W2), (1, 0, 2, 3))
    # (N, c_out, M) is already NCHW once the spatial dim is unflattened.
    return out.reshape(N, c_out, H2, W2)


# ----------------------------- pure-JAX reference -----------------------------

def _bilinear_up_x2_align_corners(x):
    N, H, W, C = x.shape
    Ho, Wo = 2 * H, 2 * W
    sy = jnp.arange(Ho, dtype=jnp.float32) * (H - 1) / (Ho - 1)
    sx = jnp.arange(Wo, dtype=jnp.float32) * (W - 1) / (Wo - 1)
    y0 = jnp.floor(sy).astype(jnp.int32); y1 = jnp.clip(y0 + 1, 0, H - 1)
    x0 = jnp.floor(sx).astype(jnp.int32); x1 = jnp.clip(x0 + 1, 0, W - 1)
    fy = (sy - y0.astype(jnp.float32))[None, :, None, None]
    fx = (sx - x0.astype(jnp.float32))[None, None, :, None]
    g = lambda yi, xi: x[:, yi][:, :, xi]
    top = g(y0, x0) * (1 - fx) + g(y0, x1) * fx
    bot = g(y1, x0) * (1 - fx) + g(y1, x1) * fx
    return top * (1 - fy) + bot * fy


def up_forward_ref(x1_nchw, x2_nchw, raw_params):
    x1 = jnp.transpose(x1_nchw, (0, 2, 3, 1)).astype(jnp.float32)
    x2 = jnp.transpose(x2_nchw, (0, 2, 3, 1)).astype(jnp.float32)
    up = _bilinear_up_x2_align_corners(x1)
    dY = x2.shape[1] - up.shape[1]
    dX = x2.shape[2] - up.shape[2]
    up = jnp.pad(up, ((0, 0), (dY // 2, dY - dY // 2),
                      (dX // 2, dX - dX // 2), (0, 0)))
    x = jnp.concatenate([x2, up], axis=-1)

    def conv(z, w, pad):
        return lax.conv_general_dilated(z, w, (1, 1), pad,
                                        dimension_numbers=('NHWC', 'HWIO', 'NHWC'))

    def bnorm(z, p):
        gamma, beta, mean, var = p
        return (z - mean) / jnp.sqrt(var + BN_EPS) * gamma + beta

    (w1, bn1), (w2, bn2), (w3, bn3), (wd, bnd) = raw_params
    identity = bnorm(conv(x, wd[None, None], 'VALID'), bnd)
    y = jax.nn.relu(bnorm(conv(x, w1[None, None], 'VALID'), bn1))
    y = jax.nn.relu(bnorm(conv(y, w2, [(1, 1), (1, 1)]), bn2))
    y = bnorm(conv(y, w3[None, None], 'VALID'), bn3)
    out = jax.nn.relu(y + identity)
    return jnp.transpose(out, (0, 3, 1, 2))


# ----------------------------- main -----------------------------

if __name__ == "__main__":
    key = jax.random.PRNGKey(0)
    k_x1, k_x2, k_p = jax.random.split(key, 3)

    # Small shapes: Up(in_channels=8, out_channels=4, bilinear=True)
    N, C1, H1, W1 = 2, 4, 8, 8        # x1 (low-res feature map)
    C2, H2, W2 = 4, 16, 16            # x2 (skip connection)
    in_channels = C1 + C2             # concat channels feeding Bottleneck
    out_channels = 4
    mid_channels = in_channels // 2   # bilinear=True -> mid = in_channels // 2

    x1 = jax.random.normal(k_x1, (N, C1, H1, W1), jnp.float32)
    x2 = jax.random.normal(k_x2, (N, C2, H2, W2), jnp.float32)

    raw = init_params(k_p, in_channels, mid_channels, out_channels)
    folded = fold_params(raw)

    ref = up_forward_ref(x1, x2, raw)

    # Per-image grid ("parallel" over N): v7x-friendly default.
    out = up_forward(x1, x2, folded, fuse_batch=False)
    jax.block_until_ready(out)
    assert out.shape == (N, out_channels, H2, W2), out.shape
    err = float(jnp.max(jnp.abs(out - ref)))
    assert err < 1e-3, f"per-image grid path: max abs err = {err}"

    # Whole batch in one grid step, batch folded onto the lane axis: v5e/v6e path.
    out_fused = up_forward(x1, x2, folded, fuse_batch=True)
    jax.block_until_ready(out_fused)
    err_fused = float(jnp.max(jnp.abs(out_fused - ref)))
    assert err_fused < 1e-3, f"fused-batch path: max abs err = {err_fused}"

    print("KERNEL_OK")
</pallas_src>

<mosaic_0001>
module attributes {stable_mosaic.version = 11 : i64} {
  func.func @_up_bottleneck_kernel(%arg0: i32, %arg1: memref<64x256xf32, #tpu.memory_space<vmem>>, %arg2: memref<4x256xf32, #tpu.memory_space<vmem>>, %arg3: memref<1x4x64xf32, #tpu.memory_space<vmem>>, %arg4: memref<1x4x256xf32, #tpu.memory_space<vmem>>, %arg5: memref<8x8xf32, #tpu.memory_space<vmem>>, %arg6: memref<4x36xf32, #tpu.memory_space<vmem>>, %arg7: memref<4x4xf32, #tpu.memory_space<vmem>>, %arg8: memref<12x1xf32, #tpu.memory_space<vmem>>, %arg9: memref<1x4x256xf32, #tpu.memory_space<vmem>>) attributes {dimension_semantics = [#tpu.dimension_semantics<parallel>], iteration_bounds = array<i64: 2>, scalar_prefetch = 0 : i64, scratch_operands = 0 : i64, tpu.core_type = #tpu.core_type<tc>, window_params = [{pipeline_mode = #tpu.pipeline_mode<synchronous>, transform_indices = @transform_0, window_bounds = array<i64: 64, 256>}, {pipeline_mode = #tpu.pipeline_mode<synchronous>, transform_indices = @transform_1, window_bounds = array<i64: 4, 256>}, {transform_indices = @transform_2, window_bounds = array<i64: 1, 4, 64>}, {transform_indices = @transform_3, window_bounds = array<i64: 1, 4, 256>}, {pipeline_mode = #tpu.pipeline_mode<synchronous>, transform_indices = @transform_4, window_bounds = array<i64: 8, 8>}, {pipeline_mode = #tpu.pipeline_mode<synchronous>, transform_indices = @transform_5, window_bounds = array<i64: 4, 36>}, {pipeline_mode = #tpu.pipeline_mode<synchronous>, transform_indices = @transform_6, window_bounds = array<i64: 4, 4>}, {pipeline_mode = #tpu.pipeline_mode<synchronous>, transform_indices = @transform_7, window_bounds = array<i64: 12, 1>}, {transform_indices = @transform_8, window_bounds = array<i64: 1, 4, 256>}]} {
    %c0 = arith.constant 0 : index
    %c0_0 = arith.constant 0 : index
    %c0_1 = arith.constant 0 : index
    %0 = vector.load %arg4[%c0, %c0_0, %c0_1] : memref<1x4x256xf32, #tpu.memory_space<vmem>>, vector<1x4x256xf32>
    %1 = vector.shape_cast %0 : vector<1x4x256xf32> to vector<4x256xf32>
    %c0_2 = arith.constant 0 : index
    %c0_3 = arith.constant 0 : index
    %2 = vector.load %arg1[%c0_2, %c0_3] : memref<64x256xf32, #tpu.memory_space<vmem>>, vector<64x256xf32>
    %c0_4 = arith.constant 0 : index
    %c0_5 = arith.constant 0 : index
    %c0_6 = arith.constant 0 : index
    %3 = vector.load %arg3[%c0_4, %c0_5, %c0_6] : memref<1x4x64xf32, #tpu.memory_space<vmem>>, vector<1x4x64xf32>
    %4 = vector.shape_cast %3 : vector<1x4x64xf32> to vector<4x64xf32>
    %cst = arith.constant dense<0.000000e+00> : vector<4x256xf32>
    %5 = tpu.matmul %4, %2, %cst {dimension_numbers = #tpu.dot_dimension_numbers<[1], [0], [0], [1], [0, 0, 1, 1], [], []>} : vector<4x64xf32>, vector<64x256xf32>, vector<4x256xf32> -> vector<4x256xf32>
    %6 = tpu.concatenate %1, %5 in 0 : vector<4x256xf32>, vector<4x256xf32> -> vector<8x256xf32>
    %c0_7 = arith.constant 0 : index
    %c0_8 = arith.constant 0 : index
    %7 = vector.load %arg8[%c0_7, %c0_8] : memref<12x1xf32, #tpu.memory_space<vmem>>, vector<12x1xf32>
    %c0_9 = arith.constant 0 : index
    %c0_10 = arith.constant 0 : index
    %8 = vector.load %arg5[%c0_9, %c0_10] : memref<8x8xf32, #tpu.memory_space<vmem>>, vector<8x8xf32>
    %cst_11 = arith.constant dense<0.000000e+00> : vector<8x256xf32>
    %9 = tpu.matmul %8, %6, %cst_11 {dimension_numbers = #tpu.dot_dimension_numbers<[1], [0], [0], [1], [0, 0, 1, 1], [], []>} : vector<8x8xf32>, vector<8x256xf32>, vector<8x256xf32> -> vector<8x256xf32>
    %10 = vector.extract_strided_slice %7 {offsets = [0, 0], sizes = [8, 1], strides = [1, 1]} : vector<12x1xf32> to vector<8x1xf32>
    %11 = vector.broadcast %10 : vector<8x1xf32> to vector<8x256xf32>
    %12 = arith.addf %9, %11 : vector<8x256xf32>
    %13 = vector.extract_strided_slice %12 {offsets = [0, 0], sizes = [4, 256], strides = [1, 1]} : vector<8x256xf32> to vector<4x256xf32>
    %cst_12 = arith.constant 0.000000e+00 : f32
    %14 = vector.broadcast %cst_12 : f32 to vector<4x256xf32>
    %15 = arith.maximumf %13, %14 : vector<4x256xf32>
    %16 = vector.extract_strided_slice %12 {offsets = [4, 0], sizes = [4, 256], strides = [1, 1]} : vector<8x256xf32> to vector<4x256xf32>
    %c0_13 = arith.constant 0 : index
    %c0_14 = arith.constant 0 : index
    %17 = vector.load %arg2[%c0_13, %c0_14] : memref<4x256xf32, #tpu.memory_space<vmem>>, vector<4x256xf32>
    %18 = vector.extract_strided_slice %17 {offsets = [0, 0], sizes = [1, 256], strides = [1, 1]} : vector<4x256xf32> to vector<1x256xf32>
    %19 = vector.extract_strided_slice %17 {offsets = [1, 0], sizes = [1, 256], strides = [1, 1]} : vector<4x256xf32> to vector<1x256xf32>
    %20 = vector.extract_strided_slice %17 {offsets = [2, 0], sizes = [1, 256], strides = [1, 1]} : vector<4x256xf32> to vector<1x256xf32>
    %21 = vector.extract_strided_slice %17 {offsets = [3, 0], sizes = [1, 256], strides = [1, 1]} : vector<4x256xf32> to vector<1x256xf32>
    %22 = vector.extract_strided_slice %15 {offsets = [0, 240], sizes = [4, 16], strides = [1, 1]} : vector<4x256xf32> to vector<4x16xf32>
    %23 = vector.extract_strided_slice %15 {offsets = [0, 0], sizes = [4, 240], strides = [1, 1]} : vector<4x256xf32> to vector<4x240xf32>
    %24 = tpu.concatenate %22, %23 in 1 : vector<4x16xf32>, vector<4x240xf32> -> vector<4x256xf32>
    %25 = vector.broadcast %18 : vector<1x256xf32> to vector<4x256xf32>
    %26 = arith.mulf %24, %25 : vector<4x256xf32>
    %27 = vector.extract_strided_slice %15 {offsets = [0, 16], sizes = [4, 240], strides = [1, 1]} : vector<4x256xf32> to vector<4x240xf32>
    %28 = vector.extract_strided_slice %15 {offsets = [0, 0], sizes = [4, 16], strides = [1, 1]} : vector<4x256xf32> to vector<4x16xf32>
    %29 = tpu.concatenate %27, %28 in 1 : vector<4x240xf32>, vector<4x16xf32> -> vector<4x256xf32>
    %30 = vector.broadcast %19 : vector<1x256xf32> to vector<4x256xf32>
    %31 = arith.mulf %29, %30 : vector<4x256xf32>
    %32 = tpu.concatenate %26, %15, %31 in 0 : vector<4x256xf32>, vector<4x256xf32>, vector<4x256xf32> -> vector<12x256xf32>
    %33 = vector.extract_strided_slice %32 {offsets = [0, 255], sizes = [12, 1], strides = [1, 1]} : vector<12x256xf32> to vector<12x1xf32>
    %34 = vector.extract_strided_slice %32 {offsets = [0, 0], sizes = [12, 255], strides = [1, 1]} : vector<12x256xf32> to vector<12x255xf32>
    %35 = tpu.concatenate %33, %34 in 1 : vector<12x1xf32>, vector<12x255xf32> -> vector<12x256xf32>
    %36 = vector.broadcast %20 : vector<1x256xf32> to vector<12x256xf32>
    %37 = arith.mulf %35, %36 : vector<12x256xf32>
    %38 = vector.extract_strided_slice %32 {offsets = [0, 1], sizes = [12, 255], strides = [1, 1]} : vector<12x256xf32> to vector<12x255xf32>
    %39 = vector.extract_strided_slice %32 {offsets = [0, 0], sizes = [12, 1], strides = [1, 1]} : vector<12x256xf32> to vector<12x1xf32>
    %40 = tpu.concatenate %38, %39 in 1 : vector<12x255xf32>, vector<12x1xf32> -> vector<12x256xf32>
    %41 = vector.broadcast %21 : vector<1x256xf32> to vector<12x256xf32>
    %42 = arith.mulf %40, %41 : vector<12x256xf32>
    %43 = tpu.concatenate %37, %32, %42 in 0 : vector<12x256xf32>, vector<12x256xf32>, vector<12x256xf32> -> vector<36x256xf32>
    %c0_15 = arith.constant 0 : index
    %c0_16 = arith.constant 0 : index
    %44 = vector.load %arg6[%c0_15, %c0_16] : memref<4x36xf32, #tpu.memory_space<vmem>>, vector<4x36xf32>
    %cst_17 = arith.constant dense<0.000000e+00> : vector<4x256xf32>
    %45 = tpu.matmul %44, %43, %cst_17 {dimension_numbers = #tpu.dot_dimension_numbers<[1], [0], [0], [1], [0, 0, 1, 1], [], []>} : vector<4x36xf32>, vector<36x256xf32>, vector<4x256xf32> -> vector<4x256xf32>
    %46 = vector.extract_strided_slice %7 {offsets = [8, 0], sizes = [4, 1], strides = [1, 1]} : vector<12x1xf32> to vector<4x1xf32>
    %47 = vector.broadcast %46 : vector<4x1xf32> to vector<4x256xf32>
    %48 = arith.addf %45, %47 : vector<4x256xf32>
    %cst_18 = arith.constant 0.000000e+00 : f32
    %49 = vector.broadcast %cst_18 : f32 to vector<4x256xf32>
    %50 = arith.maximumf %48, %49 : vector<4x256xf32>
    %c0_19 = arith.constant 0 : index
    %c0_20 = arith.constant 0 : index
    %51 = vector.load %arg7[%c0_19, %c0_20] : memref<4x4xf32, #tpu.memory_space<vmem>>, vector<4x4xf32>
    %cst_21 = arith.constant dense<0.000000e+00> : vector<4x256xf32>
    %52 = tpu.matmul %51, %50, %cst_21 {dimension_numbers = #tpu.dot_dimension_numbers<[1], [0], [0], [1], [0, 0, 1, 1], [], []>} : vector<4x4xf32>, vector<4x256xf32>, vector<4x256xf32> -> vector<4x256xf32>
    %53 = arith.addf %52, %16 : vector<4x256xf32>
    %cst_22 = arith.constant 0.000000e+00 : f32
    %54 = vector.broadcast %cst_22 : f32 to vector<4x256xf32>
    %55 = arith.maximumf %53, %54 : vector<4x256xf32>
    %c0_23 = arith.constant 0 : index
    %c0_24 = arith.constant 0 : index
    %c0_25 = arith.constant 0 : index
    %56 = vector.load %arg9[%c0_23, %c0_24, %c0_25] : memref<1x4x256xf32, #tpu.memory_space<vmem>>, vector<1x4x256xf32>
    %57 = vector.shape_cast %56 : vector<1x4x256xf32> to vector<4x256xf32>
    %58 = vector.shape_cast %55 : vector<4x256xf32> to vector<1x4x256xf32>
    tpu.vector_store %arg9[%c0_23, %c0_24, %c0_25], %58 {strides = array<i32>} : memref<1x4x256xf32, #tpu.memory_space<vmem>>, vector<1x4x256xf32>,
    return
  }
  func.func @transform_0(%arg0: i32) -> (i32, i32) {
    %c0_i32 = arith.constant 0 : i32
    %c0_i32_0 = arith.constant 0 : i32
    %c0_i32_1 = arith.constant 0 : i32
    return %c0_i32, %c0_i32_0 : i32, i32
  }
  func.func @transform_1(%arg0: i32) -> (i32, i32) {
    %c0_i32 = arith.constant 0 : i32
    %c0_i32_0 = arith.constant 0 : i32
    %c0_i32_1 = arith.constant 0 : i32
    return %c0_i32, %c0_i32_0 : i32, i32
  }
  func.func @transform_2(%arg0: i32) -> (i32, i32, i32) {
    %c0_i32 = arith.constant 0 : i32
    %c0_i32_0 = arith.constant 0 : i32
    %c0_i32_1 = arith.constant 0 : i32
    return %arg0, %c0_i32, %c0_i32_0 : i32, i32, i32
  }
  func.func @transform_3(%arg0: i32) -> (i32, i32, i32) {
    %c0_i32 = arith.constant 0 : i32
    %c0_i32_0 = arith.constant 0 : i32
    %c0_i32_1 = arith.constant 0 : i32
    return %arg0, %c0_i32, %c0_i32_0 : i32, i32, i32
  }
  func.func @transform_4(%arg0: i32) -> (i32, i32) {
    %c0_i32 = arith.constant 0 : i32
    %c0_i32_0 = arith.constant 0 : i32
    %c0_i32_1 = arith.constant 0 : i32
    return %c0_i32, %c0_i32_0 : i32, i32
  }
  func.func @transform_5(%arg0: i32) -> (i32, i32) {
    %c0_i32 = arith.constant 0 : i32
    %c0_i32_0 = arith.constant 0 : i32
    %c0_i32_1 = arith.constant 0 : i32
    return %c0_i32, %c0_i32_0 : i32, i32
  }
  func.func @transform_6(%arg0: i32) -> (i32, i32) {
    %c0_i32 = arith.constant 0 : i32
    %c0_i32_0 = arith.constant 0 : i32
    %c0_i32_1 = arith.constant 0 : i32
    return %c0_i32, %c0_i32_0 : i32, i32
  }
  func.func @transform_7(%arg0: i32) -> (i32, i32) {
    %c0_i32 = arith.constant 0 : i32
    %c0_i32_0 = arith.constant 0 : i32
    %c0_i32_1 = arith.constant 0 : i32
    return %c0_i32, %c0_i32_0 : i32, i32
  }
  func.func @transform_8(%arg0: i32) -> (i32, i32, i32) {
    %c0_i32 = arith.constant 0 : i32
    %c0_i32_0 = arith.constant 0 : i32
    %c0_i32_1 = arith.constant 0 : i32
    return %arg0, %c0_i32, %c0_i32_0 : i32, i32, i32
  }
}

</mosaic_0001>

<llo_original>
// kernel: tpu_custom_call.1
$region0: #{tpu_custom_call.1}
  #allocation0 [shape = 'u32[]', space=smem, size = 0x4, offset = 0x4, fixed_abs, tag = 'smem constant byte address 0x4 - core index']
  #allocation1 [shape = 'u32[144,128]{1,0:T(1,128)}', space=vmem, size = 0x12000, scoped, tag = 'internal scratch']
  %s0 = inlined_call_operand.hbm [shape: f32[64,256], index: 0, kind: input, shape index: {}]
  %s1 = inlined_call_operand.vmem [shape: f32[4,256], index: 1, kind: input, shape index: {}]
  %s2 = inlined_call_operand.hbm [shape: f32[2,4,64], index: 2, kind: input, shape index: {}]
  %s3 = inlined_call_operand.vmem [shape: f32[2,4,256], index: 3, kind: input, shape index: {}]
  %s4 = inlined_call_operand.vmem [shape: f32[8,8], index: 4, kind: input, shape index: {}]
  %s5 = inlined_call_operand.hbm [shape: f32[4,36], index: 5, kind: input, shape index: {}]
  %s6 = inlined_call_operand.vmem [shape: f32[4,4], index: 6, kind: input, shape index: {}]
  %s7 = inlined_call_operand.vmem [shape: f32[12,1], index: 7, kind: input, shape index: {}]
  %s8 = inlined_call_operand.hbm [shape: f32[2,4,256], index: 8, kind: output, shape index: {}]
  %s9 = sld [smem:[#allocation0]]
  $region77: #{tpu_custom_call.1} parent=0
    _
  %s11 = ssub.s32 1, %s9
  %s12 = scalar_select 0, %s11, %s9
  $region1: #{tpu_custom_call.1} parent=0
    #allocation2 [shape = 'u8[65536]{0}', space=vmem, size = 0x10000, scoped, tag = 'input window, operand 0, single buffered']
    #allocation3 [shape = 's32[2]{0}', space=sflag, size = 0x8, scoped, tag = 'scoped memory for tpu_custom_call.1']
    #allocation4 [shape = 's32[2]{0}', space=sflag, size = 0x8, scoped, tag = 'scoped memory for tpu_custom_call.1']
    #allocation5 [shape = 'u8[4096]{0}', space=vmem, size = 0x1000, scoped, tag = 'input window, operand 2']
    #allocation6 [shape = 's32[2]{0}', space=sflag, size = 0x8, scoped, tag = 'scoped memory for tpu_custom_call.1']
    #allocation7 [shape = 'u8[2048]{0}', space=vmem, size = 0x800, scoped, tag = 'input window, operand 5, single buffered']
    #allocation8 [shape = 'u8[8192]{0}', space=vmem, size = 0x2000, scoped, tag = 'output window, operand 0']
    %13 = vsyncpa [#allocation3], 0
    %14 = vsyncpa [#allocation6], 0
    %s15 = scalar_lea.sflag [#allocation6], 1
    %16 = vsyncpa %s15, 0
    %17 = vsyncpa [#allocation4], 0
    %s18 = scalar_lea.sflag [#allocation4], 1
    %19 = vsyncpa %s18, 0
    loop: start=0, step=1, limit=4
    $region2: #{tpu_custom_call.1} parent=1 // loop_pre_header
      _
    $region3: #{tpu_custom_call.1} parent=1 // loop_header
      %s21 = sphi 0, %s25
      %p22 = scmp.ge.s32.totalorder %s21, 4
      %s29 = sphi 0, %s29
      %s31 = sphi 0, %s29
      %s32 = sphi 0, %s31
      %s46 = sphi 0, %s32
      %s50 = sphi 0, %s50
      %s52 = sphi 0, %s50
      %s53 = sphi 0, %s52
      %s67 = sphi 0, %s53
      %s73 = sphi 0, %s75
      %s76 = sphi 0, %s73
      %s77 = sphi 0, %s76
      %s93 = sphi 0, %s77
      %s99 = sphi 0, %s101
      %s102 = sphi 0, %s99
      %s103 = sphi 0, %s102
      %s119 = sphi 0, %s103
      %s123 = sphi 0, %s123
      %s125 = sphi 0, %s123
      %s126 = sphi 0, %s125
      %s140 = sphi 0, %s126
      %s144 = sphi 0, %s144
      %s146 = sphi 0, %s144
      %s147 = sphi 0, %s146
      %s161 = sphi 0, %s147
      %s165 = sphi 0, %s165
      %s167 = sphi 0, %s165
      %s168 = sphi 0, %s167
      %s182 = sphi 0, %s168
      %s186 = sphi 0, %s186
      %s188 = sphi 0, %s186
      %s189 = sphi 0, %s188
      %s203 = sphi 0, %s189
      %s209 = sphi 0, %s211
      %s212 = sphi 0, %s209
      %s213 = sphi 0, %s212
      %s229 = sphi 0, %s213
    $region4: #{tpu_custom_call.1} parent=1 // loop_header_branch
      %24 = sbr.rel (%p22) target = $region8
    $region5: #{tpu_custom_call.1} parent=1 // loop_body
      %s26 = ssub.s32 %s21, 1
      %s27 = ssub.s32 %s21, 2
      %s28 = sadd.s32 %s21, 1
      %s30 = sadd.s32 %s29, 1
      %p33 = scmp.eq.s32.totalorder %s21, 1
      %p34 = scmp.ne.s32.totalorder %s29, %s31
      %p35 = scmp.eq.s32.totalorder %s21, 0
      %p36 = por %p34, %p35
      %p37 = scmp.ne.s32.totalorder %s29, %s31
      %p38 = scmp.eq.s32.totalorder %s26, 1
      %p39 = por %p37, %p38
      %p40 = scmp.ne.s32.totalorder %s31, %s32
      %p41 = scmp.eq.s32.totalorder %s26, 0
      %p42 = por %p40, %p41
      %p43 = scmp.ne.s32.totalorder %s31, %s32
      %p44 = scmp.eq.s32.totalorder %s27, 1
      %p45 = por %p43, %p44
      %p47 = scmp.ne.s32.totalorder %s32, %s46
      %p48 = scmp.eq.s32.totalorder %s27, 0
      %p49 = por %p47, %p48
      %s51 = sadd.s32 %s50, 1
      %p54 = scmp.eq.s32.totalorder %s21, 1
      %p55 = scmp.ne.s32.totalorder %s50, %s52
      %p56 = scmp.eq.s32.totalorder %s21, 0
      %p57 = por %p55, %p56
      %p58 = scmp.ne.s32.totalorder %s50, %s52
      %p59 = scmp.eq.s32.totalorder %s26, 1
      %p60 = por %p58, %p59
      %p61 = scmp.ne.s32.totalorder %s52, %s53
      %p62 = scmp.eq.s32.totalorder %s26, 0
      %p63 = por %p61, %p62
      %p64 = scmp.ne.s32.totalorder %s52, %s53
      %p65 = scmp.eq.s32.totalorder %s27, 1
      %p66 = por %p64, %p65
      %p68 = scmp.ne.s32.totalorder %s53, %s67
      %p69 = scmp.eq.s32.totalorder %s27, 0
      %p70 = por %p68, %p69
      %s71 = ssub.s32 %s21, %s28
      %p72 = scmp.eq.s32.totalorder %s71, 0
      %s74 = sadd.s32 %s73, 1
      %s75 = scalar_select %p72, %s73, %s74
      %p78 = pneg %p72
      %p79 = scmp.eq.s32.totalorder %s21, 1
      %p80 = por %p78, %p79
      %p81 = scmp.ne.s32.totalorder %s73, %s76
      %p82 = scmp.eq.s32.totalorder %s21, 0
      %p83 = por %p81, %p82
      %p84 = scmp.ne.s32.totalorder %s73, %s76
      %p85 = scmp.eq.s32.totalorder %s26, 1
      %p86 = por %p84, %p85
      %p87 = scmp.ne.s32.totalorder %s76, %s77
      %p88 = scmp.eq.s32.totalorder %s26, 0
      %p89 = por %p87, %p88
      %p90 = scmp.ne.s32.totalorder %s76, %s77
      %p91 = scmp.eq.s32.totalorder %s27, 1
      %p92 = por %p90, %p91
      %p94 = scmp.ne.s32.totalorder %s77, %s93
      %p95 = scmp.eq.s32.totalorder %s27, 0
      %p96 = por %p94, %p95
      %s97 = ssub.s32 %s21, %s28
      %p98 = scmp.eq.s32.totalorder %s97, 0
      %s100 = sadd.s32 %s99, 1
      %s101 = scalar_select %p98, %s99, %s100
      %p104 = pneg %p98
      %p105 = scmp.eq.s32.totalorder %s21, 1
      %p106 = por %p104, %p105
      %p107 = scmp.ne.s32.totalorder %s99, %s102
      %p108 = scmp.eq.s32.totalorder %s21, 0
      %p109 = por %p107, %p108
      %p110 = scmp.ne.s32.totalorder %s99, %s102
      %p111 = scmp.eq.s32.totalorder %s26, 1
      %p112 = por %p110, %p111
      %p113 = scmp.ne.s32.totalorder %s102, %s103
      %p114 = scmp.eq.s32.totalorder %s26, 0
      %p115 = por %p113, %p114
      %p116 = scmp.ne.s32.totalorder %s102, %s103
      %p117 = scmp.eq.s32.totalorder %s27, 1
      %p118 = por %p116, %p117
      %p120 = scmp.ne.s32.totalorder %s103, %s119
      %p121 = scmp.eq.s32.totalorder %s27, 0
      %p122 = por %p120, %p121
      %s124 = sadd.s32 %s123, 1
      %p127 = scmp.eq.s32.totalorder %s21, 1
      %p128 = scmp.ne.s32.totalorder %s123, %s125
      %p129 = scmp.eq.s32.totalorder %s21, 0
      %p130 = por %p128, %p129
      %p131 = scmp.ne.s32.totalorder %s123, %s125
      %p132 = scmp.eq.s32.totalorder %s26, 1
      %p133 = por %p131, %p132
      %p134 = scmp.ne.s32.totalorder %s125, %s126
      %p135 = scmp.eq.s32.totalorder %s26, 0
      %p136 = por %p134, %p135
      %p137 = scmp.ne.s32.totalorder %s125, %s126
      %p138 = scmp.eq.s32.totalorder %s27, 1
      %p139 = por %p137, %p138
      %p141 = scmp.ne.s32.totalorder %s126, %s140
      %p142 = scmp.eq.s32.totalorder %s27, 0
      %p143 = por %p141, %p142
      %s145 = sadd.s32 %s144, 1
      %p148 = scmp.eq.s32.totalorder %s21, 1
      %p149 = scmp.ne.s32.totalorder %s144, %s146
      %p150 = scmp.eq.s32.totalorder %s21, 0
      %p151 = por %p149, %p150
      %p152 = scmp.ne.s32.totalorder %s144, %s146
      %p153 = scmp.eq.s32.totalorder %s26, 1
      %p154 = por %p152, %p153
      %p155 = scmp.ne.s32.totalorder %s146, %s147
      %p156 = scmp.eq.s32.totalorder %s26, 0
      %p157 = por %p155, %p156
      %p158 = scmp.ne.s32.totalorder %s146, %s147
      %p159 = scmp.eq.s32.totalorder %s27, 1
      %p160 = por %p158, %p159
      %p162 = scmp.ne.s32.totalorder %s147, %s161
      %p163 = scmp.eq.s32.totalorder %s27, 0
      %p164 = por %p162, %p163
      %s166 = sadd.s32 %s165, 1
      %p169 = scmp.eq.s32.totalorder %s21, 1
      %p170 = scmp.ne.s32.totalorder %s165, %s167
      %p171 = scmp.eq.s32.totalorder %s21, 0
      %p172 = por %p170, %p171
      %p173 = scmp.ne.s32.totalorder %s165, %s167
      %p174 = scmp.eq.s32.totalorder %s26, 1
      %p175 = por %p173, %p174
      %p176 = scmp.ne.s32.totalorder %s167, %s168
      %p177 = scmp.eq.s32.totalorder %s26, 0
      %p178 = por %p176, %p177
      %p179 = scmp.ne.s32.totalorder %s167, %s168
      %p180 = scmp.eq.s32.totalorder %s27, 1
      %p181 = por %p179, %p180
      %p183 = scmp.ne.s32.totalorder %s168, %s182
      %p184 = scmp.eq.s32.totalorder %s27, 0
      %p185 = por %p183, %p184
      %s187 = sadd.s32 %s186, 1
      %p190 = scmp.eq.s32.totalorder %s21, 1
      %p191 = scmp.ne.s32.totalorder %s186, %s188
      %p192 = scmp.eq.s32.totalorder %s21, 0
      %p193 = por %p191, %p192
      %p194 = scmp.ne.s32.totalorder %s186, %s188
      %p195 = scmp.eq.s32.totalorder %s26, 1
      %p196 = por %p194, %p195
      %p197 = scmp.ne.s32.totalorder %s188, %s189
      %p198 = scmp.eq.s32.totalorder %s26, 0
      %p199 = por %p197, %p198
      %p200 = scmp.ne.s32.totalorder %s188, %s189
      %p201 = scmp.eq.s32.totalorder %s27, 1
      %p202 = por %p200, %p201
      %p204 = scmp.ne.s32.totalorder %s189, %s203
      %p205 = scmp.eq.s32.totalorder %s27, 0
      %p206 = por %p204, %p205
      %s207 = ssub.s32 %s21, %s28
      %p208 = scmp.eq.s32.totalorder %s207, 0
      %s210 = sadd.s32 %s209, 1
      %s211 = scalar_select %p208, %s209, %s210
      %p214 = pneg %p208
      %p215 = scmp.eq.s32.totalorder %s21, 1
      %p216 = por %p214, %p215
      %p217 = scmp.ne.s32.totalorder %s209, %s212
      %p218 = scmp.eq.s32.totalorder %s21, 0
      %p219 = por %p217, %p218
      %p220 = scmp.ne.s32.totalorder %s209, %s212
      %p221 = scmp.eq.s32.totalorder %s26, 1
      %p222 = por %p220, %p221
      %p223 = scmp.ne.s32.totalorder %s212, %s213
      %p224 = scmp.eq.s32.totalorder %s26, 0
      %p225 = por %p223, %p224
      %p226 = scmp.ne.s32.totalorder %s212, %s213
      %p227 = scmp.eq.s32.totalorder %s27, 1
      %p228 = por %p226, %p227
      %p230 = scmp.ne.s32.totalorder %s213, %s229
      %p231 = scmp.eq.s32.totalorder %s27, 0
      %p232 = por %p230, %p231
      %p233 = scmp.le.s32.totalorder 1, %s21
      %p234 = scmp.lt.s32.totalorder %s21, 3
      %p235 = pnand %p233, %p234
      %p236 = pneg %p235
      // Predicated region
      $region9: #{tpu_custom_call.1} parent=5 // pred_check
        _
      $region10: #{tpu_custom_call.1} parent=5 // pred_check_branch
        %238 = sbr.rel (%p235) target = $region12
      $region11: #{tpu_custom_call.1} parent=5 // pred_region
        %s239 = ssub.s32 %s21, 1
        // Predicated region
        $region13: #{tpu_custom_call.1} parent=11 // pred_check
          %p240 = pneg %p42
        $region14: #{tpu_custom_call.1} parent=11 // pred_check_branch
          %242 = sbr.rel (%p240) target = $region16
        $region15: #{tpu_custom_call.1} parent=11 // pred_region
          %s244 = ssub.s32 2048, 2048
          %245 = vsyncadd [#allocation3], %s244
          %s246 = sshll.u32 [#allocation2], 4
          %s247 = int_to_ptr.vmem [resolvable:$true] %s246
          %252 = dma.hbm_to_vmem [thread:$0]  %s0, 2048, %s247, [#allocation3], 256, 256, 16
        $region16: #{tpu_custom_call.1} parent=11 // pred_fallthru
          _
        // Predicated region
        $region17: #{tpu_custom_call.1} parent=11 // pred_check
          %p253 = pneg %p63
        $region18: #{tpu_custom_call.1} parent=11 // pred_check_branch
          %255 = sbr.rel (%p253) target = $region20
        $region19: #{tpu_custom_call.1} parent=11 // pred_region
          _
        $region20: #{tpu_custom_call.1} parent=11 // pred_fallthru
          _
        // Predicated region
        $region21: #{tpu_custom_call.1} parent=11 // pred_check
          %p256 = pneg %p136
        $region22: #{tpu_custom_call.1} parent=11 // pred_check_branch
          %258 = sbr.rel (%p256) target = $region24
        $region23: #{tpu_custom_call.1} parent=11 // pred_region
          _
        $region24: #{tpu_custom_call.1} parent=11 // pred_fallthru
          _
        // Predicated region
        $region25: #{tpu_custom_call.1} parent=11 // pred_check
          %p259 = pneg %p157
        $region26: #{tpu_custom_call.1} parent=11 // pred_check_branch
          %261 = sbr.rel (%p259) target = $region28
        $region27: #{tpu_custom_call.1} parent=11 // pred_region
          %s263 = ssub.s32 64, 64
          %264 = vsyncadd [#allocation6], %s263
          %s266 = sshll.u32 [#allocation7], 4
          %s267 = int_to_ptr.vmem [resolvable:$true] %s266
          %269 = dma.hbm_to_vmem [thread:$0]  %s5, 64, %s267, [#allocation6]
        $region28: #{tpu_custom_call.1} parent=11 // pred_fallthru
          _
        // Predicated region
        $region29: #{tpu_custom_call.1} parent=11 // pred_check
          %p270 = pneg %p178
        $region30: #{tpu_custom_call.1} parent=11 // pred_check_branch
          %272 = sbr.rel (%p270) target = $region32
        $region31: #{tpu_custom_call.1} parent=11 // pred_region
          _
        $region32: #{tpu_custom_call.1} parent=11 // pred_fallthru
          _
        // Predicated region
        $region33: #{tpu_custom_call.1} parent=11 // pred_check
          %p273 = pneg %p199
        $region34: #{tpu_custom_call.1} parent=11 // pred_check_branch
          %275 = sbr.rel (%p273) target = $region36
        $region35: #{tpu_custom_call.1} parent=11 // pred_region
          _
        $region36: #{tpu_custom_call.1} parent=11 // pred_fallthru
          _
      $region12: #{tpu_custom_call.1} parent=5 // pred_fallthru
        _
      %p276 = scmp.lt.s32.totalorder %s21, 2
      // Predicated region
      $region37: #{tpu_custom_call.1} parent=5 // pred_check
        %p277 = pneg %p276
      $region38: #{tpu_custom_call.1} parent=5 // pred_check_branch
        %279 = sbr.rel (%p277) target = $region40
      $region39: #{tpu_custom_call.1} parent=5 // pred_region
        // Predicated region
        $region41: #{tpu_custom_call.1} parent=39 // pred_check
          %p280 = pneg %p83
        $region42: #{tpu_custom_call.1} parent=39 // pred_check_branch
          %282 = sbr.rel (%p280) target = $region44
        $region43: #{tpu_custom_call.1} parent=39 // pred_region
          %s283 = sand.u32 %s21, 1
          %s284 = scalar_lea.sflag [#allocation6], %s283
          %s285 = sand.u32 %s73, 1
          %s286 = smul.addr %s285, 4
          %s287 = scalar_lea.vmem [#allocation5], %s286
          %s289 = ssub.s32 64, 64
          %290 = vsyncadd %s284, %s289
          %s291 = smul.addr %s21, 64
          %s292 = scalar_lea.hbm %s2, %s291
          %s294 = sshll.u32 %s287, 4
          %s295 = int_to_ptr.vmem [resolvable:$true] %s294
          %297 = dma.hbm_to_vmem [thread:$0]  %s292, 64, %s295, %s284
        $region44: #{tpu_custom_call.1} parent=39 // pred_fallthru
          _
        // Predicated region
        $region45: #{tpu_custom_call.1} parent=39 // pred_check
          %p298 = pneg %p109
        $region46: #{tpu_custom_call.1} parent=39 // pred_check_branch
          %300 = sbr.rel (%p298) target = $region48
        $region47: #{tpu_custom_call.1} parent=39 // pred_region
          %p301 = scmp.lt.s32.totalorder %s21, 1
          %s302 = scalar_select %p301, %s21, 1
          %s303 = smul.addr %s302, 2
          %s304 = smul.addr %s303, 4
          %s305 = scalar_lea.vmem %s3, %s304
        $region48: #{tpu_custom_call.1} parent=39 // pred_fallthru
          _
      $region40: #{tpu_custom_call.1} parent=5 // pred_fallthru
        _
      %p306 = scmp.le.s32.totalorder 1, %s21
      %p307 = scmp.lt.s32.totalorder %s21, 3
      %p308 = pnand %p306, %p307
      %p309 = pneg %p308
      // Predicated region
      $region49: #{tpu_custom_call.1} parent=5 // pred_check
        _
      $region50: #{tpu_custom_call.1} parent=5 // pred_check_branch
        %311 = sbr.rel (%p308) target = $region52
      $region51: #{tpu_custom_call.1} parent=5 // pred_region
        %s312 = ssub.s32 %s21, 1
        // Predicated region
        $region53: #{tpu_custom_call.1} parent=51 // pred_check
          %p313 = pneg %p42
        $region54: #{tpu_custom_call.1} parent=51 // pred_check_branch
          %315 = sbr.rel (%p313) target = $region56
        $region55: #{tpu_custom_call.1} parent=51 // pred_region
          %316 = dma.done [#allocation3], 2048
        $region56: #{tpu_custom_call.1} parent=51 // pred_fallthru
          _
        %s317 = sand.u32 %s26, 1
        %s318 = scalar_lea.sflag [#allocation6], %s317
        %s319 = sand.u32 %s76, 1
        %s320 = smul.addr %s319, 4
        %s321 = scalar_lea.vmem [#allocation5], %s320
        // Predicated region
        $region57: #{tpu_custom_call.1} parent=51 // pred_check
          %p322 = pneg %p89
        $region58: #{tpu_custom_call.1} parent=51 // pred_check_branch
          %324 = sbr.rel (%p322) target = $region60
        $region59: #{tpu_custom_call.1} parent=51 // pred_region
          %325 = dma.done %s318, 64
        $region60: #{tpu_custom_call.1} parent=51 // pred_fallthru
          _
        // Predicated region
        $region61: #{tpu_custom_call.1} parent=51 // pred_check
          %p326 = pneg %p157
        $region62: #{tpu_custom_call.1} parent=51 // pred_check_branch
          %328 = sbr.rel (%p326) target = $region64
        $region63: #{tpu_custom_call.1} parent=51 // pred_region
          %329 = dma.done [#allocation6], 64
        $region64: #{tpu_custom_call.1} parent=51 // pred_fallthru
          _
        %p330 = pneg %p42
        %p331 = pneg %p39
        %p332 = pneg %p63
        %p333 = pneg %p60
        %s334 = sand.u32 %s26, 1
        %s335 = scalar_lea.sflag [#allocation6], %s334
        %s336 = sand.u32 %s76, 1
        %s337 = smul.addr %s336, 4
        %s338 = scalar_lea.vmem [#allocation5], %s337
        %p339 = pneg %p89
        %p340 = pneg %p86
        %p341 = scmp.lt.s32.totalorder %s26, 1
        %s342 = scalar_select %p341, %s26, 1
        %s343 = smul.addr %s342, 2
        %s344 = smul.addr %s343, 4
        %s345 = scalar_lea.vmem %s3, %s344
        %p346 = pneg %p115
        %p347 = pneg %p112
        %p348 = pneg %p136
        %p349 = pneg %p133
        %p350 = pneg %p157
        %p351 = pneg %p154
        %p352 = pneg %p178
        %p353 = pneg %p175
        %p354 = pneg %p199
        %p355 = pneg %p196
        %p356 = pneg %p225
        %p357 = pneg %p222
        %s358 = sand.u32 %s212, 1
        %s359 = scalar_lea.sflag [#allocation4], %s358
        %s360 = sand.u32 %s212, 1
        %s361 = smul.addr %s360, 8
        %s362 = scalar_lea.vmem [#allocation8], %s361
        %p363 = scmp.lt.s32.totalorder %s26, 1
        %s364 = scalar_select %p363, %s26, 1
        %s365 = smul.addr %s364, 2
        %s366 = smul.addr %s365, 4
        %s367 = scalar_lea.vmem %s3, %s366
        %v368 = vld [vmem:[%s367] sm:$0xff]
        %v369 = vld [vmem:[#allocation2] sm:$0xff]
        %v370 = vld [vmem:[#allocation2 + $0x8] sm:$0xff]
        %v371 = vld [vmem:[#allocation2 + $0x10] sm:$0xff]
        %v372 = vld [vmem:[#allocation2 + $0x18] sm:$0xff]
        %v373 = vld [vmem:[#allocation2 + $0x20] sm:$0xff]
        %v374 = vld [vmem:[#allocation2 + $0x28] sm:$0xff]
        %v375 = vld [vmem:[#allocation2 + $0x30] sm:$0xff]
        %v376 = vld [vmem:[#allocation2 + $0x38] sm:$0xff]
        %v377 = vld [vmem:[#allocation2 + $0x40] sm:$0xff]
        %v378 = vld [vmem:[#allocation2 + $0x48] sm:$0xff]
        %v379 = vld [vmem:[#allocation2 + $0x50] sm:$0xff]
        %v380 = vld [vmem:[#allocation2 + $0x58] sm:$0xff]
        %v381 = vld [vmem:[#allocation2 + $0x60] sm:$0xff]
        %v382 = vld [vmem:[#allocation2 + $0x68] sm:$0xff]
        %v383 = vld [vmem:[#allocation2 + $0x70] sm:$0xff]
        %v384 = vld [vmem:[#allocation2 + $0x78] sm:$0xff]
        %v385 = vld [vmem:[%s321] sm:$0xf]
        %vm386 = vcmask 523264
        %v388 = vsel %vm386, %v385, 0
        %390 = vmatprep.subr.mxu0 %v370
        %391 = vmatpush1.msra.mxu0 %v369
        %392 = vmatprep.subr.mxu0 %v372
        %393 = vmatpush1.msra.mxu0 %v371
        %394 = vmatprep.subr.mxu0 %v374
        %395 = vmatpush1.msra.mxu0 %v373
        %396 = vmatprep.subr.mxu0 %v376
        %397 = vmatpush1.msra.mxu0 %v375
        %398 = vmatprep.subr.mxu0 %v378
        %399 = vmatpush1.msra.mxu0 %v377
        %400 = vmatprep.subr.mxu0 %v380
        %401 = vmatpush1.msra.mxu0 %v379
        %402 = vmatprep.subr.mxu0 %v382
        %403 = vmatpush1.msra.mxu0 %v381
        %404 = vmatprep.subr.mxu0 %v384
        %405 = vmatpush1.msra.mxu0 %v383
        %406 = vmatprep.subr.mxu0 0.0
        %407 = vmatpush1.msra.mxu0 0.0
        %408 = vmatprep.subr.mxu0 0.0
        %409 = vmatpush1.msra.mxu0 0.0
        %410 = vmatprep.subr.mxu0 0.0
        %411 = vmatpush1.msra.mxu0 0.0
        %412 = vmatprep.subr.mxu0 0.0
        %413 = vmatpush1.msra.mxu0 0.0
        %414 = vmatprep.subr.mxu0 0.0
        %415 = vmatpush1.msra.mxu0 0.0
        %416 = vmatprep.subr.mxu0 0.0
        %417 = vmatpush1.msra.mxu0 0.0
        %418 = vmatprep.subr.mxu0 0.0
        %419 = vmatpush1.msra.mxu0 0.0
        %420 = vmatprep.subr.mxu0 0.0
        %421 = vmatpush1.msra.mxu0 0.0
        %422 = vmatprep.subr.mxu0 0.0
        %423 = vmatpush1.msra.mxu0 0.0
        %424 = vmatprep.subr.mxu0 0.0
        %425 = vmatpush1.msra.mxu0 0.0
        %426 = vmatprep.subr.mxu0 0.0
        %427 = vmatpush1.msra.mxu0 0.0
        %428 = vmatprep.subr.mxu0 0.0
        %429 = vmatpush1.msra.mxu0 0.0
        %430 = vmatprep.subr.mxu0 0.0
        %431 = vmatpush1.msra.mxu0 0.0
        %432 = vmatprep.subr.mxu0 0.0
        %433 = vmatpush1.msra.mxu0 0.0
        %434 = vmatprep.subr.mxu0 0.0
        %435 = vmatpush1.msra.mxu0 0.0
        %436 = vmatprep.subr.mxu0 0.0
        %437 = vmatpush1.msra.mxu0 0.0
        %438 = vmatprep.subr.mxu0 0.0
        %439 = vmatpush1.msra.mxu0 0.0
        %440 = vmatprep.subr.mxu0 0.0
        %441 = vmatpush1.msra.mxu0 0.0
        %442 = vmatprep.subr.mxu0 0.0
        %443 = vmatpush1.msra.mxu0 0.0
        %444 = vmatprep.subr.mxu0 0.0
        %445 = vmatpush1.msra.mxu0 0.0
        %446 = vmatprep.subr.mxu0 0.0
        %447 = vmatpush1.msra.mxu0 0.0
        %448 = vmatprep.subr.mxu0 0.0
        %449 = vmatpush1.msra.mxu0 0.0
        %450 = vmatprep.subr.mxu0 0.0
        %451 = vmatpush1.msra.mxu0 0.0
        %452 = vmatprep.subr.mxu0 0.0
        %453 = vmatpush1.msra.mxu0 0.0
        %454 = vmatprep.mubr.f32.mxu0 0.0
        %455 = vmatmul.mubr.f32.gmra.mrb[0].mxu0 %v388
        %v456 = vpop.f32.mrb[0].mxu0
        %v457 = vadd.f32 0.0, %v456
        %v458 = vpop.f32.mrb[0].mxu0
        %v459 = vadd.f32 0.0, %v458
        %460 = vdwg.mxu0
        %v462 = vcombine.high %v368, %v368
        %v466 = vrot.slane %v457, 4
        %v467 = vrot.slane %v459, 4
        %vm470 = vcmask 1043456
        %v471 = vsel %vm470, %v368, %v466
        %v472 = vsel %vm470, %v462, %v467
        %v473 = vld [vmem:[%s7] sm:$0xff]
        %v474 = vld [vmem:[%s7 + $0x8] sm:$0xf]
        %v475 = vld [vmem:[%s4] sm:$0xff]
        %477 = vset.pattern.permute.xlu0 0
        %478 = vperm.xlu0 %477, %v473
        %v479 = vpop.permute.xlu0 %478
        %vm481 = vcmask 64512
        %v483 = vsel %vm481, %v475, 0
        %485 = vmatprep.subr.mxu0 %v472
        %486 = vmatpush1.msra.mxu0 %v471
        %487 = vmatprep.subr.mxu0 0.0
        %488 = vmatpush1.msra.mxu0 0.0
        %489 = vmatprep.subr.mxu0 0.0
        %490 = vmatpush1.msra.mxu0 0.0
        %491 = vmatprep.subr.mxu0 0.0
        %492 = vmatpush1.msra.mxu0 0.0
        %493 = vmatprep.subr.mxu0 0.0
        %494 = vmatpush1.msra.mxu0 0.0
        %495 = vmatprep.subr.mxu0 0.0
        %496 = vmatpush1.msra.mxu0 0.0
        %497 = vmatprep.subr.mxu0 0.0
        %498 = vmatpush1.msra.mxu0 0.0
        %499 = vmatprep.subr.mxu0 0.0
        %500 = vmatpush1.msra.mxu0 0.0
        %501 = vmatprep.subr.mxu0 0.0
        %502 = vmatpush1.msra.mxu0 0.0
        %503 = vmatprep.subr.mxu0 0.0
        %504 = vmatpush1.msra.mxu0 0.0
        %505 = vmatprep.subr.mxu0 0.0
        %506 = vmatpush1.msra.mxu0 0.0
        %507 = vmatprep.subr.mxu0 0.0
        %508 = vmatpush1.msra.mxu0 0.0
        %509 = vmatprep.subr.mxu0 0.0
        %510 = vmatpush1.msra.mxu0 0.0
        %511 = vmatprep.subr.mxu0 0.0
        %512 = vmatpush1.msra.mxu0 0.0
        %513 = vmatprep.subr.mxu0 0.0
        %514 = vmatpush1.msra.mxu0 0.0
        %515 = vmatprep.subr.mxu0 0.0
        %516 = vmatpush1.msra.mxu0 0.0
        %517 = vmatprep.subr.mxu0 0.0
        %518 = vmatpush1.msra.mxu0 0.0
        %519 = vmatprep.subr.mxu0 0.0
        %520 = vmatpush1.msra.mxu0 0.0
        %521 = vmatprep.subr.mxu0 0.0
        %522 = vmatpush1.msra.mxu0 0.0
        %523 = vmatprep.subr.mxu0 0.0
        %524 = vmatpush1.msra.mxu0 0.0
        %525 = vmatprep.subr.mxu0 0.0
        %526 = vmatpush1.msra.mxu0 0.0
        %527 = vmatprep.subr.mxu0 0.0
        %528 = vmatpush1.msra.mxu0 0.0
        %529 = vmatprep.subr.mxu0 0.0
        %530 = vmatpush1.msra.mxu0 0.0
        %531 = vmatprep.subr.mxu0 0.0
        %532 = vmatpush1.msra.mxu0 0.0
        %533 = vmatprep.subr.mxu0 0.0
        %534 = vmatpush1.msra.mxu0 0.0
        %535 = vmatprep.subr.mxu0 0.0
        %536 = vmatpush1.msra.mxu0 0.0
        %537 = vmatprep.subr.mxu0 0.0
        %538 = vmatpush1.msra.mxu0 0.0
        %539 = vmatprep.subr.mxu0 0.0
        %540 = vmatpush1.msra.mxu0 0.0
        %541 = vmatprep.subr.mxu0 0.0
        %542 = vmatpush1.msra.mxu0 0.0
        %543 = vmatprep.subr.mxu0 0.0
        %544 = vmatpush1.msra.mxu0 0.0
        %545 = vmatprep.subr.mxu0 0.0
        %546 = vmatpush1.msra.mxu0 0.0
        %547 = vmatprep.subr.mxu0 0.0
        %548 = vmatpush1.msra.mxu0 0.0
        %549 = vmatprep.mubr.f32.mxu0 0.0
        %550 = vmatmul.mubr.f32.gmra.mrb[0].mxu0 %v483
        %v551 = vpop.f32.mrb[0].mxu0
        %v552 = vadd.f32 %v479, %v551
        %v553 = vpop.f32.mrb[0].mxu0
        %v554 = vadd.f32 %v479, %v553
        %555 = vdwg.mxu0
        %v556 = vmax.f32 %v552, 0.0
        %v557 = vmax.f32 %v554, 0.0
        %v558 = vld [vmem:[%s1] sm:$0xff]
        %560 = vrot.lane.b32.xlu0 %v557, 16
        %v561 = vpop.permute.xlu0 %560
        %564 = vrot.lane.b32.xlu0 %v556, 16
        %v565 = vpop.permute.xlu0 %564
        %vm566 = vcmask 130048
        %v567 = vsel %vm566, %v565, %v561
        %v570 = vsel %vm566, %v561, %v565
        %v572 = vlaneseq
        %v573 = vshrl.u32 %v572, 7
        %v574 = vsub.s32 0, %v573
        %v575 = vrot.slane %v558, %v574
        %v576 = vlaneseq
        %v577 = vshrl.u32 %v576, 7
        %v578 = vsub.s32 4, %v577
        %v579 = vrot.slane %v558, %v578
        %v582 = vlaneseq
        %v583 = vshrl.u32 %v582, 7
        %v584 = vsub.s32 0, %v583
        %v585 = vrot.slane %v575, %v584
        %v586 = vlaneseq
        %v587 = vshrl.u32 %v586, 7
        %v588 = vsub.s32 0, %v587
        %v589 = vrot.slane %v579, %v588
        %v590 = vmul.f32 %v570, %v585
        %v591 = vmul.f32 %v567, %v589
        %592 = vrot.lane.b32.xlu0 %v556, 112
        %v593 = vpop.permute.xlu0 %592
        %594 = vrot.lane.b32.xlu0 %v557, 112
        %v595 = vpop.permute.xlu0 %594
        %vm596 = vcmask 916480
        %v597 = vsel %vm596, %v593, %v595
        %v601 = vsel %vm596, %v595, %v593
        %v602 = vlaneseq
        %v603 = vshrl.u32 %v602, 7
        %v604 = vsub.s32 1, %v603
        %v605 = vrot.slane %v558, %v604
        %v606 = vlaneseq
        %v607 = vshrl.u32 %v606, 7
        %v608 = vsub.s32 5, %v607
        %v609 = vrot.slane %v558, %v608
        %v612 = vlaneseq
        %v613 = vshrl.u32 %v612, 7
        %v614 = vsub.s32 1, %v613
        %v615 = vrot.slane %v605, %v614
        %v616 = vlaneseq
        %v617 = vshrl.u32 %v616, 7
        %v618 = vsub.s32 1, %v617
        %v619 = vrot.slane %v609, %v618
        %v620 = vmul.f32 %v597, %v615
        %v621 = vmul.f32 %v601, %v619
        %v622 = vrot.slane %v556, 4
        %v623 = vrot.slane %v557, 4
        %v626 = vsel %vm470, %v590, %v622
        %v627 = vsel %vm470, %v591, %v623
        %630 = vrot.lane.b32.xlu0 %v627, 1
        %v631 = vpop.permute.xlu0 %630
        %632 = vrot.lane.b32.xlu0 %v621, 1
        %v633 = vpop.permute.xlu0 %632
        %638 = vrot.lane.b32.xlu0 %v626, 1
        %v639 = vpop.permute.xlu0 %638
        %640 = vrot.lane.b32.xlu0 %v620, 1
        %v641 = vpop.permute.xlu0 %640
        %vm642 = vcmask 7168
        %v643 = vsel %vm642, %v639, %v631
        %v644 = vsel %vm642, %v641, %v633
        %v649 = vsel %vm642, %v631, %v639
        %v650 = vsel %vm642, %v633, %v641
        %v651 = vlaneseq
        %v652 = vshrl.u32 %v651, 7
        %v653 = vsub.s32 2, %v652
        %v654 = vrot.slane %v558, %v653
        %v655 = vlaneseq
        %v656 = vshrl.u32 %v655, 7
        %v657 = vsub.s32 6, %v656
        %v658 = vrot.slane %v558, %v657
        %v661 = vlaneseq
        %v662 = vshrl.u32 %v661, 7
        %v663 = vsub.s32 2, %v662
        %v664 = vrot.slane %v654, %v663
        %v665 = vlaneseq
        %v666 = vshrl.u32 %v665, 7
        %v667 = vsub.s32 2, %v666
        %v668 = vrot.slane %v658, %v667
        %v669 = vmul.f32 %v649, %v664
        %v670 = vmul.f32 %v643, %v668
        %v671 = vmul.f32 %v650, %v664
        %v672 = vmul.f32 %v644, %v668
        %673 = vrot.lane.b32.xlu0 %v626, 127
        %v674 = vpop.permute.xlu0 %673
        %675 = vrot.lane.b32.xlu0 %v627, 127
        %v676 = vpop.permute.xlu0 %675
        %677 = vrot.lane.b32.xlu0 %v620, 127
        %v678 = vpop.permute.xlu0 %677
        %679 = vrot.lane.b32.xlu0 %v621, 127
        %v680 = vpop.permute.xlu0 %679
        %vm681 = vcmask 1039360
        %v682 = vsel %vm681, %v674, %v676
        %v683 = vsel %vm681, %v678, %v680
        %v690 = vsel %vm681, %v676, %v674
        %v691 = vsel %vm681, %v680, %v678
        %v692 = vlaneseq
        %v693 = vshrl.u32 %v692, 7
        %v694 = vsub.s32 3, %v693
        %v695 = vrot.slane %v558, %v694
        %v696 = vlaneseq
        %v697 = vshrl.u32 %v696, 7
        %v698 = vsub.s32 7, %v697
        %v699 = vrot.slane %v558, %v698
        %v702 = vlaneseq
        %v703 = vshrl.u32 %v702, 7
        %v704 = vsub.s32 3, %v703
        %v705 = vrot.slane %v695, %v704
        %v706 = vlaneseq
        %v707 = vshrl.u32 %v706, 7
        %v708 = vsub.s32 3, %v707
        %v709 = vrot.slane %v699, %v708
        %v710 = vmul.f32 %v682, %v705
        %v711 = vmul.f32 %v690, %v709
        %v712 = vmul.f32 %v683, %v705
        %v713 = vmul.f32 %v691, %v709
        %v714 = vrot.slane %v626, 4
        %v715 = vrot.slane %v627, 4
        %v716 = vrot.slane %v620, 4
        %v717 = vsel %vm470, %v714, %v716
        %v718 = vrot.slane %v621, 4
        %v719 = vsel %vm470, %v715, %v718
        %v724 = vsel %vm470, %v671, %v714
        %v725 = vsel %vm470, %v672, %v715
        %v726 = vld [vmem:[#allocation7] sm:$0xf]
        %728 = vset.pattern.permute.xlu0 0
        %729 = vperm.xlu0 %728, %v474
        %v730 = vpop.permute.xlu0 %729
        %vm732 = vcmask 293888
        %v734 = vsel %vm732, %v726, 0
        %v737 = vsel %vm470, %v712, 0
        %v740 = vsel %vm470, %v713, 0
        %742 = vmatprep.subr.mxu0 %v670
        %743 = vmatpush1.msra.mxu0 %v669
        %744 = vmatprep.subr.mxu0 %v725
        %745 = vmatpush1.msra.mxu0 %v724
        %746 = vmatprep.subr.mxu0 %v719
        %747 = vmatpush1.msra.mxu0 %v717
        %748 = vmatprep.subr.mxu0 %v711
        %749 = vmatpush1.msra.mxu0 %v710
        %750 = vmatprep.subr.mxu0 %v740
        %751 = vmatpush1.msra.mxu0 %v737
        %752 = vmatprep.subr.mxu0 0.0
        %753 = vmatpush1.msra.mxu0 0.0
        %754 = vmatprep.subr.mxu0 0.0
        %755 = vmatpush1.msra.mxu0 0.0
        %756 = vmatprep.subr.mxu0 0.0
        %757 = vmatpush1.msra.mxu0 0.0
        %758 = vmatprep.subr.mxu0 0.0
        %759 = vmatpush1.msra.mxu0 0.0
        %760 = vmatprep.subr.mxu0 0.0
        %761 = vmatpush1.msra.mxu0 0.0
        %762 = vmatprep.subr.mxu0 0.0
        %763 = vmatpush1.msra.mxu0 0.0
        %764 = vmatprep.subr.mxu0 0.0
        %765 = vmatpush1.msra.mxu0 0.0
        %766 = vmatprep.subr.mxu0 0.0
        %767 = vmatpush1.msra.mxu0 0.0
        %768 = vmatprep.subr.mxu0 0.0
        %769 = vmatpush1.msra.mxu0 0.0
        %770 = vmatprep.subr.mxu0 0.0
        %771 = vmatpush1.msra.mxu0 0.0
        %772 = vmatprep.subr.mxu0 0.0
        %773 = vmatpush1.msra.mxu0 0.0
        %774 = vmatprep.subr.mxu0 0.0
        %775 = vmatpush1.msra.mxu0 0.0
        %776 = vmatprep.subr.mxu0 0.0
        %777 = vmatpush1.msra.mxu0 0.0
        %778 = vmatprep.subr.mxu0 0.0
        %779 = vmatpush1.msra.mxu0 0.0
        %780 = vmatprep.subr.mxu0 0.0
        %781 = vmatpush1.msra.mxu0 0.0
        %782 = vmatprep.subr.mxu0 0.0
        %783 = vmatpush1.msra.mxu0 0.0
        %784 = vmatprep.subr.mxu0 0.0
        %785 = vmatpush1.msra.mxu0 0.0
        %786 = vmatprep.subr.mxu0 0.0
        %787 = vmatpush1.msra.mxu0 0.0
        %788 = vmatprep.subr.mxu0 0.0
        %789 = vmatpush1.msra.mxu0 0.0
        %790 = vmatprep.subr.mxu0 0.0
        %791 = vmatpush1.msra.mxu0 0.0
        %792 = vmatprep.subr.mxu0 0.0
        %793 = vmatpush1.msra.mxu0 0.0
        %794 = vmatprep.subr.mxu0 0.0
        %795 = vmatpush1.msra.mxu0 0.0
        %796 = vmatprep.subr.mxu0 0.0
        %797 = vmatpush1.msra.mxu0 0.0
        %798 = vmatprep.subr.mxu0 0.0
        %799 = vmatpush1.msra.mxu0 0.0
        %800 = vmatprep.subr.mxu0 0.0
        %801 = vmatpush1.msra.mxu0 0.0
        %802 = vmatprep.subr.mxu0 0.0
        %803 = vmatpush1.msra.mxu0 0.0
        %804 = vmatprep.subr.mxu0 0.0
        %805 = vmatpush1.msra.mxu0 0.0
        %806 = vmatprep.mubr.f32.mxu0 0.0
        %807 = vmatmul.mubr.f32.gmra.mrb[0].mxu0 %v734
        %v808 = vpop.f32.mrb[0].mxu0
        %v809 = vadd.f32 %v730, %v808
        %v810 = vpop.f32.mrb[0].mxu0
        %v811 = vadd.f32 %v730, %v810
        %812 = vdwg.mxu0
        %v813 = vmax.f32 %v809, 0.0
        %v814 = vmax.f32 %v811, 0.0
        %v815 = vld [vmem:[%s6] sm:$0xf]
        %v818 = vrot.slane %v552, 4
        %v819 = vrot.slane %v554, 4
        %vm822 = vcmask 31744
        %v824 = vsel %vm822, %v815, 0
        %v827 = vsel %vm470, %v813, 0
        %v830 = vsel %vm470, %v814, 0
        %832 = vmatprep.subr.mxu0 %v830
        %833 = vmatpush1.msra.mxu0 %v827
        %834 = vmatprep.subr.mxu0 0.0
        %835 = vmatpush1.msra.mxu0 0.0
        %836 = vmatprep.subr.mxu0 0.0
        %837 = vmatpush1.msra.mxu0 0.0
        %838 = vmatprep.subr.mxu0 0.0
        %839 = vmatpush1.msra.mxu0 0.0
        %840 = vmatprep.subr.mxu0 0.0
        %841 = vmatpush1.msra.mxu0 0.0
        %842 = vmatprep.subr.mxu0 0.0
        %843 = vmatpush1.msra.mxu0 0.0
        %844 = vmatprep.subr.mxu0 0.0
        %845 = vmatpush1.msra.mxu0 0.0
        %846 = vmatprep.subr.mxu0 0.0
        %847 = vmatpush1.msra.mxu0 0.0
        %848 = vmatprep.subr.mxu0 0.0
        %849 = vmatpush1.msra.mxu0 0.0
        %850 = vmatprep.subr.mxu0 0.0
        %851 = vmatpush1.msra.mxu0 0.0
        %852 = vmatprep.subr.mxu0 0.0
        %853 = vmatpush1.msra.mxu0 0.0
        %854 = vmatprep.subr.mxu0 0.0
        %855 = vmatpush1.msra.mxu0 0.0
        %856 = vmatprep.subr.mxu0 0.0
        %857 = vmatpush1.msra.mxu0 0.0
        %858 = vmatprep.subr.mxu0 0.0
        %859 = vmatpush1.msra.mxu0 0.0
        %860 = vmatprep.subr.mxu0 0.0
        %861 = vmatpush1.msra.mxu0 0.0
        %862 = vmatprep.subr.mxu0 0.0
        %863 = vmatpush1.msra.mxu0 0.0
        %864 = vmatprep.subr.mxu0 0.0
        %865 = vmatpush1.msra.mxu0 0.0
        %866 = vmatprep.subr.mxu0 0.0
        %867 = vmatpush1.msra.mxu0 0.0
        %868 = vmatprep.subr.mxu0 0.0
        %869 = vmatpush1.msra.mxu0 0.0
        %870 = vmatprep.subr.mxu0 0.0
        %871 = vmatpush1.msra.mxu0 0.0
        %872 = vmatprep.subr.mxu0 0.0
        %873 = vmatpush1.msra.mxu0 0.0
        %874 = vmatprep.subr.mxu0 0.0
        %875 = vmatpush1.msra.mxu0 0.0
        %876 = vmatprep.subr.mxu0 0.0
        %877 = vmatpush1.msra.mxu0 0.0
        %878 = vmatprep.subr.mxu0 0.0
        %879 = vmatpush1.msra.mxu0 0.0
        %880 = vmatprep.subr.mxu0 0.0
        %881 = vmatpush1.msra.mxu0 0.0
        %882 = vmatprep.subr.mxu0 0.0
        %883 = vmatpush1.msra.mxu0 0.0
        %884 = vmatprep.subr.mxu0 0.0
        %885 = vmatpush1.msra.mxu0 0.0
        %886 = vmatprep.subr.mxu0 0.0
        %887 = vmatpush1.msra.mxu0 0.0
        %888 = vmatprep.subr.mxu0 0.0
        %889 = vmatpush1.msra.mxu0 0.0
        %890 = vmatprep.subr.mxu0 0.0
        %891 = vmatpush1.msra.mxu0 0.0
        %892 = vmatprep.subr.mxu0 0.0
        %893 = vmatpush1.msra.mxu0 0.0
        %894 = vmatprep.subr.mxu0 0.0
        %895 = vmatpush1.msra.mxu0 0.0
        %896 = vmatprep.mubr.f32.mxu0 0.0
        %897 = vmatmul.mubr.f32.gmra.mrb[0].mxu0 %v824
        %v898 = vpop.f32.mrb[0].mxu0
        %v899 = vadd.f32 %v818, %v898
        %v900 = vpop.f32.mrb[0].mxu0
        %v901 = vadd.f32 %v819, %v900
        %902 = vdwg.mxu0
        %v903 = vmax.f32 %v899, 0.0
        %v904 = vmax.f32 %v901, 0.0
        %v907 = vcombine.low %v903, %v904
        %909 = vst [vmem:[%s362] sm:$0xff] %v907
        %s910 = sand.u32 %s212, 1
        %s911 = scalar_lea.sflag [#allocation4], %s910
        %s912 = sand.u32 %s212, 1
        %s913 = smul.addr %s912, 8
        %s914 = scalar_lea.vmem [#allocation8], %s913
        // Predicated region
        $region65: #{tpu_custom_call.1} parent=51 // pred_check
          %p915 = pneg %p222
        $region66: #{tpu_custom_call.1} parent=51 // pred_check_branch
          %917 = sbr.rel (%p915) target = $region68
        $region67: #{tpu_custom_call.1} parent=51 // pred_region
          %s919 = ssub.s32 128, 128
          %920 = vsyncadd %s911, %s919
          %s921 = smul.addr %s26, 2
          %s922 = smul.addr %s921, 64
          %s923 = scalar_lea.hbm %s8, %s922
          %s925 = sshll.u32 %s914, 4
          %s926 = int_to_ptr.vmem [resolvable:$true] %s925
          %928 = dma.vmem_to_hbm [thread:$0]  %s926, 128, %s923, %s911
        $region68: #{tpu_custom_call.1} parent=51 // pred_fallthru
          _
      $region52: #{tpu_custom_call.1} parent=5 // pred_fallthru
        _
      %p929 = scmp.le.s32.totalorder 2, %s21
      // Predicated region
      $region69: #{tpu_custom_call.1} parent=5 // pred_check
        %p930 = pneg %p929
      $region70: #{tpu_custom_call.1} parent=5 // pred_check_branch
        %932 = sbr.rel (%p930) target = $region72
      $region71: #{tpu_custom_call.1} parent=5 // pred_region
        %s933 = ssub.s32 %s21, 2
        // Predicated region
        $region73: #{tpu_custom_call.1} parent=71 // pred_check
          %p934 = pneg %p228
        $region74: #{tpu_custom_call.1} parent=71 // pred_check_branch
          %936 = sbr.rel (%p934) target = $region76
        $region75: #{tpu_custom_call.1} parent=71 // pred_region
          %s937 = sand.u32 %s213, 1
          %s938 = scalar_lea.sflag [#allocation4], %s937
          %s939 = sand.u32 %s213, 1
          %s940 = smul.addr %s939, 8
          %s941 = scalar_lea.vmem [#allocation8], %s940
          %942 = dma.done %s938, 128
        $region76: #{tpu_custom_call.1} parent=71 // pred_fallthru
          _
      $region72: #{tpu_custom_call.1} parent=5 // pred_fallthru
        _
    $region6: #{tpu_custom_call.1} parent=1 // loop_footer
      %s25 = sadd.s32 1, %s21
    $region7: #{tpu_custom_call.1} parent=1 // loop_footer_branch
      %20 = sbr.rel target = $region3
    $region8: #{tpu_custom_call.1} parent=1 // loop_exit
      _
    %943 = vsyncpa [#allocation3], 1
    %s944 = scalar_lea.sflag [#allocation3], 1
    %945 = vsyncpa %s944, 1
    %946 = vsyncpa [#allocation6], 1
    %s947 = scalar_lea.sflag [#allocation6], 1
    %948 = vsyncpa %s947, 1
    %949 = vsyncpa [#allocation4], 1
    %s950 = scalar_lea.sflag [#allocation4], 1
    %951 = vsyncpa %s950, 1

</llo_original>
